<compile_context>
chip_gen: v6e
topology: v6e:2x2x1
jax: 0.10.0
libtpu: 0.0.40
codegen_flags: <defaults>
</compile_context>

<pallas_src>
import jax
import jax.numpy as jnp
from jax.experimental import pallas as pl
from jax.experimental.pallas import tpu as pltpu


def _round_up(x, m):
    return (x + m - 1) // m * m


def _patch_embed_kernel(x_ref, w_ref, b_ref, o_ref):
    # x_ref: (TM, Kp) bf16, w_ref: (Kp, TN) bf16, b_ref: (1, TN) f32,
    # o_ref: (TM, TN) out dtype.  f32 accumulation on the MXU.
    acc = jnp.dot(x_ref[...], w_ref[...], preferred_element_type=jnp.float32)
    o_ref[...] = (acc + b_ref[...]).astype(o_ref.dtype)


def _pick_tm(M, K_pad, TN, out_bytes, vmem_budget=16 * 1024 * 1024):
    """Largest M-tile (multiple of 8, <=1024) whose double-buffered working
    set (patches tile + output tile; weight/bias are per-E-tile resident)
    stays under a conservative VMEM budget."""
    tm = min(1024, _round_up(M, 8))
    while tm > 8:
        per_buf = tm * K_pad * 2 + tm * TN * out_bytes     # bf16 in, out tile
        resident = K_pad * TN * 2 + TN * 4                 # weight + bias
        if 2 * per_buf + 2 * resident <= vmem_budget:
            break
        tm //= 2
    return max(tm, 8)


def patch_embedding(x, weight, bias, patch_size, *,
                    compute_dtype=jnp.bfloat16):
    """x: (B, C, H, W); weight: (E, C, p, p) (PyTorch Conv2d layout); bias: (E,).

    Returns (B, N, E) with N = (H//p)*(W//p), matching
    `proj(x).flatten(2).transpose(1, 2)`.
    """
    B, C, H, W = x.shape
    E = weight.shape[0]
    p = patch_size
    Hp, Wp = H // p, W // p
    N = Hp * Wp
    M = B * N
    K = C * p * p
    out_dtype = x.dtype
    out_bytes = jnp.dtype(out_dtype).itemsize

    # --- patchify (wrapper-side glue, done in the bf16 compute dtype) -------
    # Per-patch feature order (c, kh, kw) matches flattening the PyTorch conv
    # weight (E, C, p, p) -> (E, C*p*p).
    # TODO(synk): with allow_input_fusion this transpose could be fused into
    # the pallas input DMA and skip its HBM round-trip entirely.
    xc = x.astype(compute_dtype)
    patches = xc.reshape(B, C, Hp, p, Wp, p)
    patches = patches.transpose(0, 2, 4, 1, 3, 5).reshape(M, K)

    # In a real model, precompute these two at init time (they are static).
    w_mat = weight.reshape(E, K).T.astype(compute_dtype)     # (K, E)
    b_row = bias.astype(jnp.float32).reshape(1, E)           # (1, E)

    # --- lane/sublane-friendly padding & tile selection ---------------------
    K_pad = _round_up(K, 128)
    E_pad = _round_up(E, 128)
    TN = 256 if E_pad % 256 == 0 else 128     # 256 matches v6e/v7x MXU width
    TM = _pick_tm(M, K_pad, TN, out_bytes)
    M_pad = _round_up(M, TM)

    if M_pad != M or K_pad != K:
        patches = jnp.pad(patches, ((0, M_pad - M), (0, K_pad - K)))
    if K_pad != K or E_pad != E:
        w_mat = jnp.pad(w_mat, ((0, K_pad - K), (0, E_pad - E)))
    if E_pad != E:
        b_row = jnp.pad(b_row, ((0, 0), (0, E_pad - E)))

    num_e_tiles = E_pad // TN
    num_m_tiles = M_pad // TM

    flops = 2 * M_pad * K_pad * E_pad
    bytes_accessed = (M_pad * K_pad * 2 * num_e_tiles      # patches per E-tile
                      + K_pad * E_pad * 2                  # weight once
                      + E_pad * 4                          # bias once
                      + M_pad * E_pad * out_bytes)         # output

    # Grid: E-tiles on the slow (outer) axis, M-tiles on the fast (inner)
    # axis, so the weight strip / bias blocks are fetched once per E-tile
    # while the patches stream.
    out = pl.pallas_call(
        _patch_embed_kernel,
        out_shape=jax.ShapeDtypeStruct((M_pad, E_pad), out_dtype),
        grid_spec=pltpu.PrefetchScalarGridSpec(
            num_scalar_prefetch=0,
            grid=(num_e_tiles, num_m_tiles),
            in_specs=[
                pl.BlockSpec((TM, K_pad), lambda j, i: (i, 0)),   # patches
                pl.BlockSpec((K_pad, TN), lambda j, i: (0, j)),   # weight
                pl.BlockSpec((1, TN), lambda j, i: (0, j)),       # bias
            ],
            out_specs=pl.BlockSpec((TM, TN), lambda j, i: (i, j)),
        ),
        compiler_params=pltpu.CompilerParams(
            dimension_semantics=("parallel", "parallel"),
        ),
        cost_estimate=pl.CostEstimate(
            flops=flops, transcendentals=0, bytes_accessed=bytes_accessed),
    )(patches, w_mat, b_row)

    out = out[:M, :E]
    return out.reshape(B, N, E)


if __name__ == "__main__":
    # Small shapes consistent with the module defaults
    # (in_channels=11, patch_size=4, embed_dim=192), small spatial/batch.
    B, C, H, W = 2, 11, 16, 16
    patch_size = 4
    embed_dim = 192

    key = jax.random.PRNGKey(0)
    kx, kw, kb = jax.random.split(key, 3)

    x = jax.random.normal(kx, (B, C, H, W), dtype=jnp.float32)

    # Deterministic Conv2d-style init (uniform in +-1/sqrt(fan_in)).
    fan_in = C * patch_size * patch_size
    bound = 1.0 / jnp.sqrt(fan_in)
    weight = jax.random.uniform(
        kw, (embed_dim, C, patch_size, patch_size),
        minval=-bound, maxval=bound, dtype=jnp.float32)
    bias = jax.random.uniform(
        kb, (embed_dim,), minval=-bound, maxval=bound, dtype=jnp.float32)

    out = patch_embedding(x, weight, bias, patch_size)
    out = jax.block_until_ready(out)

    # Pure-JAX f32 reference (stride==kernel conv as patch matmul).
    Hp, Wp = H // patch_size, W // patch_size
    patches = x.reshape(B, C, Hp, patch_size, Wp, patch_size)
    patches = patches.transpose(0, 2, 4, 1, 3, 5).reshape(B, Hp * Wp, -1)
    ref = jnp.einsum("bnk,ek->bne", patches, weight.reshape(embed_dim, -1)) + bias

    assert out.shape == (B, Hp * Wp, embed_dim), out.shape
    # Operands go through the MXU in bf16 (f32 accumulation), so compare with
    # a bf16-appropriate tolerance against the f32 reference.
    assert jnp.allclose(out, ref, atol=5e-2, rtol=5e-2), float(
        jnp.max(jnp.abs(out - ref)))
    print("KERNEL_OK")
</pallas_src>

<mosaic_0001>
module attributes {stable_mosaic.version = 11 : i64} {
  func.func @_patch_embed_kernel(%arg0: i32, %arg1: i32, %arg2: memref<32x256xbf16, #tpu.memory_space<vmem>>, %arg3: memref<256x256xbf16, #tpu.memory_space<vmem>>, %arg4: memref<1x256xf32, #tpu.memory_space<vmem>>, %arg5: memref<32x256xf32, #tpu.memory_space<vmem>>) attributes {dimension_semantics = [#tpu.dimension_semantics<parallel>, #tpu.dimension_semantics<parallel>], iteration_bounds = array<i64: 1, 1>, scalar_prefetch = 0 : i64, scratch_operands = 0 : i64, tpu.core_type = #tpu.core_type<tc>, window_params = [{transform_indices = @transform_0, window_bounds = array<i64: 32, 256>}, {transform_indices = @transform_1, window_bounds = array<i64: 256, 256>}, {transform_indices = @transform_2, window_bounds = array<i64: 1, 256>}, {transform_indices = @transform_3, window_bounds = array<i64: 32, 256>}]} {
    %c0 = arith.constant 0 : index
    %c0_0 = arith.constant 0 : index
    %0 = vector.load %arg2[%c0, %c0_0] : memref<32x256xbf16, #tpu.memory_space<vmem>>, vector<32x256xbf16>
    %c0_1 = arith.constant 0 : index
    %c0_2 = arith.constant 0 : index
    %1 = vector.load %arg3[%c0_1, %c0_2] : memref<256x256xbf16, #tpu.memory_space<vmem>>, vector<256x256xbf16>
    %cst = arith.constant dense<0.000000e+00> : vector<32x256xf32>
    %2 = tpu.matmul %0, %1, %cst {dimension_numbers = #tpu.dot_dimension_numbers<[1], [0], [0], [1], [0, 0, 1, 1], [], []>} : vector<32x256xbf16>, vector<256x256xbf16>, vector<32x256xf32> -> vector<32x256xf32>
    %c0_3 = arith.constant 0 : index
    %c0_4 = arith.constant 0 : index
    %3 = vector.load %arg4[%c0_3, %c0_4] : memref<1x256xf32, #tpu.memory_space<vmem>>, vector<1x256xf32>
    %4 = vector.broadcast %3 : vector<1x256xf32> to vector<32x256xf32>
    %5 = arith.addf %2, %4 : vector<32x256xf32>
    %c0_5 = arith.constant 0 : index
    %c0_6 = arith.constant 0 : index
    %6 = vector.load %arg5[%c0_5, %c0_6] : memref<32x256xf32, #tpu.memory_space<vmem>>, vector<32x256xf32>
    tpu.vector_store %arg5[%c0_5, %c0_6], %5 {strides = array<i32>} : memref<32x256xf32, #tpu.memory_space<vmem>>, vector<32x256xf32>,
    return
  }
  func.func @transform_0(%arg0: i32, %arg1: i32) -> (i32, i32) {
    %c0_i32 = arith.constant 0 : i32
    %c0_i32_0 = arith.constant 0 : i32
    return %arg1, %c0_i32 : i32, i32
  }
  func.func @transform_1(%arg0: i32, %arg1: i32) -> (i32, i32) {
    %c0_i32 = arith.constant 0 : i32
    %c0_i32_0 = arith.constant 0 : i32
    return %c0_i32, %arg0 : i32, i32
  }
  func.func @transform_2(%arg0: i32, %arg1: i32) -> (i32, i32) {
    %c0_i32 = arith.constant 0 : i32
    %c0_i32_0 = arith.constant 0 : i32
    return %c0_i32, %arg0 : i32, i32
  }
  func.func @transform_3(%arg0: i32, %arg1: i32) -> (i32, i32) {
    %c0_i32 = arith.constant 0 : i32
    return %arg1, %arg0 : i32, i32
  }
}

</mosaic_0001>

<llo_original>
// kernel: tpu_custom_call.1
$region0: #{tpu_custom_call.1}
  #allocation0 [shape = 'u32[]', space=smem, size = 0x4, offset = 0x4, fixed_abs, tag = 'smem constant byte address 0x4 - core index']
  #allocation1 [shape = 'u32[144,128]{1,0:T(1,128)}', space=vmem, size = 0x12000, scoped, tag = 'internal scratch']
  %s0 = inlined_call_operand.hbm [shape: bf16[32,256], index: 0, kind: input, shape index: {}]
  %s1 = inlined_call_operand.hbm [shape: bf16[256,256], index: 1, kind: input, shape index: {}]
  %s2 = inlined_call_operand.vmem [shape: f32[1,256], index: 2, kind: input, shape index: {}]
  %s3 = inlined_call_operand.hbm [shape: f32[32,256], index: 3, kind: output, shape index: {}]
  %s4 = sld [smem:[#allocation0]]
  $region30: #{tpu_custom_call.1} parent=0
    _
  %s6 = ssub.s32 1, %s4
  %s7 = scalar_select 0, %s6, %s4
  $region1: #{tpu_custom_call.1} parent=0
    #allocation2 [shape = 'u8[16384]{0}', space=vmem, size = 0x4000, scoped, tag = 'input window, operand 0, single buffered']
    #allocation3 [shape = 's32[1]{0}', space=sflag, size = 0x4, scoped, tag = 'scoped memory for tpu_custom_call.1']
    #allocation4 [shape = 's32[1]{0}', space=sflag, size = 0x4, scoped, tag = 'scoped memory for tpu_custom_call.1']
    #allocation5 [shape = 'u8[131072]{0}', space=vmem, size = 0x20000, scoped, tag = 'input window, operand 1, single buffered']
    #allocation6 [shape = 's32[1]{0}', space=sflag, size = 0x4, scoped, tag = 'scoped memory for tpu_custom_call.1']
    #allocation7 [shape = 'u8[32768]{0}', space=vmem, size = 0x8000, scoped, tag = 'output window, operand 0, single buffered']
    %8 = vsyncpa [#allocation3], 0
    %9 = vsyncpa [#allocation6], 0
    %10 = vsyncpa [#allocation4], 0
    // Predicated region
    $region2: #{tpu_custom_call.1} parent=1 // pred_check
      _
    $region3: #{tpu_custom_call.1} parent=1 // pred_check_branch
      %12 = sbr.rel (0) target = $region5
    $region4: #{tpu_custom_call.1} parent=1 // pred_region
      %s14 = ssub.s32 512, 512
      %15 = vsyncadd [#allocation3], %s14
      %s16 = sshll.u32 [#allocation2], 4
      %s17 = int_to_ptr.vmem [resolvable:$true] %s16
      %22 = dma.hbm_to_vmem [thread:$0]  %s0, 512, %s17, [#allocation3], 128, 128, 8
    $region5: #{tpu_custom_call.1} parent=1 // pred_fallthru
      _
    // Predicated region
    $region6: #{tpu_custom_call.1} parent=1 // pred_check
      _
    $region7: #{tpu_custom_call.1} parent=1 // pred_check_branch
      %24 = sbr.rel (0) target = $region9
    $region8: #{tpu_custom_call.1} parent=1 // pred_region
      %s26 = ssub.s32 4096, 4096
      %27 = vsyncadd [#allocation6], %s26
      %s28 = sshll.u32 [#allocation5], 4
      %s29 = int_to_ptr.vmem [resolvable:$true] %s28
      %34 = dma.hbm_to_vmem [thread:$0]  %s1, 4096, %s29, [#allocation6], 128, 128, 8
    $region9: #{tpu_custom_call.1} parent=1 // pred_fallthru
      _
    // Predicated region
    $region10: #{tpu_custom_call.1} parent=1 // pred_check
      _
    $region11: #{tpu_custom_call.1} parent=1 // pred_check_branch
      %36 = sbr.rel (0) target = $region13
    $region12: #{tpu_custom_call.1} parent=1 // pred_region
      _
    $region13: #{tpu_custom_call.1} parent=1 // pred_fallthru
      _
    // Predicated region
    $region14: #{tpu_custom_call.1} parent=1 // pred_check
      _
    $region15: #{tpu_custom_call.1} parent=1 // pred_check_branch
      %38 = sbr.rel (0) target = $region17
    $region16: #{tpu_custom_call.1} parent=1 // pred_region
      %39 = dma.done [#allocation3], 512
    $region17: #{tpu_custom_call.1} parent=1 // pred_fallthru
      _
    // Predicated region
    $region18: #{tpu_custom_call.1} parent=1 // pred_check
      _
    $region19: #{tpu_custom_call.1} parent=1 // pred_check_branch
      %41 = sbr.rel (0) target = $region21
    $region20: #{tpu_custom_call.1} parent=1 // pred_region
      %42 = dma.done [#allocation6], 4096
    $region21: #{tpu_custom_call.1} parent=1 // pred_fallthru
      _
    %v43 = vld [vmem:[#allocation2] sm:$0xff]
    %v44 = vld [vmem:[#allocation2 + $0x8] sm:$0xff]
    %v45 = vld [vmem:[#allocation2 + $0x10] sm:$0xff]
    %v46 = vld [vmem:[#allocation2 + $0x18] sm:$0xff]
    %v47 = vld [vmem:[#allocation5] sm:$0xff]
    %v48 = vld [vmem:[#allocation5 + $0x8] sm:$0xff]
    %v49 = vld [vmem:[#allocation5 + $0x10] sm:$0xff]
    %v50 = vld [vmem:[#allocation5 + $0x18] sm:$0xff]
    %v51 = vld [vmem:[#allocation5 + $0x20] sm:$0xff]
    %v52 = vld [vmem:[#allocation5 + $0x28] sm:$0xff]
    %v53 = vld [vmem:[#allocation5 + $0x30] sm:$0xff]
    %v54 = vld [vmem:[#allocation5 + $0x38] sm:$0xff]
    %v55 = vld [vmem:[#allocation5 + $0x40] sm:$0xff]
    %v56 = vld [vmem:[#allocation5 + $0x48] sm:$0xff]
    %v57 = vld [vmem:[#allocation5 + $0x50] sm:$0xff]
    %v58 = vld [vmem:[#allocation5 + $0x58] sm:$0xff]
    %v59 = vld [vmem:[#allocation5 + $0x60] sm:$0xff]
    %v60 = vld [vmem:[#allocation5 + $0x68] sm:$0xff]
    %v61 = vld [vmem:[#allocation5 + $0x70] sm:$0xff]
    %v62 = vld [vmem:[#allocation5 + $0x78] sm:$0xff]
    %v63 = vld [vmem:[#allocation5 + $0x80] sm:$0xff]
    %v64 = vld [vmem:[#allocation5 + $0x88] sm:$0xff]
    %v65 = vld [vmem:[#allocation5 + $0x90] sm:$0xff]
    %v66 = vld [vmem:[#allocation5 + $0x98] sm:$0xff]
    %v67 = vld [vmem:[#allocation5 + $0xa0] sm:$0xff]
    %v68 = vld [vmem:[#allocation5 + $0xa8] sm:$0xff]
    %v69 = vld [vmem:[#allocation5 + $0xb0] sm:$0xff]
    %v70 = vld [vmem:[#allocation5 + $0xb8] sm:$0xff]
    %v71 = vld [vmem:[#allocation5 + $0xc0] sm:$0xff]
    %v72 = vld [vmem:[#allocation5 + $0xc8] sm:$0xff]
    %v73 = vld [vmem:[#allocation5 + $0xd0] sm:$0xff]
    %v74 = vld [vmem:[#allocation5 + $0xd8] sm:$0xff]
    %v75 = vld [vmem:[#allocation5 + $0xe0] sm:$0xff]
    %v76 = vld [vmem:[#allocation5 + $0xe8] sm:$0xff]
    %v77 = vld [vmem:[#allocation5 + $0xf0] sm:$0xff]
    %v78 = vld [vmem:[#allocation5 + $0xf8] sm:$0xff]
    %v79 = vld [vmem:[%s2] sm:$0x3]
    %v81 = vlaneseq
    %v82 = vshrl.u32 %v81, 7
    %v83 = vsub.s32 0, %v82
    %v84 = vrot.slane %v79, %v83
    %v85 = vlaneseq
    %v86 = vshrl.u32 %v85, 7
    %v87 = vsub.s32 1, %v86
    %v88 = vrot.slane %v79, %v87
    %v95 = vunpack.c.l.b16 %v43
    %v96 = vunpack.c.h.b16 %v43
    %v97 = vunpack.c.l.b16 %v44
    %v98 = vunpack.c.h.b16 %v44
    %v99 = vunpack.c.l.b16 %v45
    %v100 = vunpack.c.h.b16 %v45
    %v101 = vunpack.c.l.b16 %v46
    %v102 = vunpack.c.h.b16 %v46
    %v103 = vpack.c.b16 %v97, %v95
    %v104 = vpack.c.b16 %v98, %v96
    %v105 = vpack.c.b16 %v101, %v99
    %v106 = vpack.c.b16 %v102, %v100
    %v143 = vunpack.c.l.b16 %v47
    %v144 = vunpack.c.h.b16 %v47
    %v145 = vunpack.c.l.b16 %v48
    %v146 = vunpack.c.h.b16 %v48
    %v147 = vunpack.c.l.b16 %v49
    %v148 = vunpack.c.h.b16 %v49
    %v149 = vunpack.c.l.b16 %v50
    %v150 = vunpack.c.h.b16 %v50
    %v151 = vunpack.c.l.b16 %v51
    %v152 = vunpack.c.h.b16 %v51
    %v153 = vunpack.c.l.b16 %v52
    %v154 = vunpack.c.h.b16 %v52
    %v155 = vunpack.c.l.b16 %v53
    %v156 = vunpack.c.h.b16 %v53
    %v157 = vunpack.c.l.b16 %v54
    %v158 = vunpack.c.h.b16 %v54
    %v159 = vunpack.c.l.b16 %v55
    %v160 = vunpack.c.h.b16 %v55
    %v161 = vunpack.c.l.b16 %v56
    %v162 = vunpack.c.h.b16 %v56
    %v163 = vunpack.c.l.b16 %v57
    %v164 = vunpack.c.h.b16 %v57
    %v165 = vunpack.c.l.b16 %v58
    %v166 = vunpack.c.h.b16 %v58
    %v167 = vunpack.c.l.b16 %v59
    %v168 = vunpack.c.h.b16 %v59
    %v169 = vunpack.c.l.b16 %v60
    %v170 = vunpack.c.h.b16 %v60
    %v171 = vunpack.c.l.b16 %v61
    %v172 = vunpack.c.h.b16 %v61
    %v173 = vunpack.c.l.b16 %v62
    %v174 = vunpack.c.h.b16 %v62
    %v175 = vunpack.c.l.b16 %v63
    %v176 = vunpack.c.h.b16 %v63
    %v177 = vunpack.c.l.b16 %v64
    %v178 = vunpack.c.h.b16 %v64
    %v179 = vunpack.c.l.b16 %v65
    %v180 = vunpack.c.h.b16 %v65
    %v181 = vunpack.c.l.b16 %v66
    %v182 = vunpack.c.h.b16 %v66
    %v183 = vunpack.c.l.b16 %v67
    %v184 = vunpack.c.h.b16 %v67
    %v185 = vunpack.c.l.b16 %v68
    %v186 = vunpack.c.h.b16 %v68
    %v187 = vunpack.c.l.b16 %v69
    %v188 = vunpack.c.h.b16 %v69
    %v189 = vunpack.c.l.b16 %v70
    %v190 = vunpack.c.h.b16 %v70
    %v191 = vunpack.c.l.b16 %v71
    %v192 = vunpack.c.h.b16 %v71
    %v193 = vunpack.c.l.b16 %v72
    %v194 = vunpack.c.h.b16 %v72
    %v195 = vunpack.c.l.b16 %v73
    %v196 = vunpack.c.h.b16 %v73
    %v197 = vunpack.c.l.b16 %v74
    %v198 = vunpack.c.h.b16 %v74
    %v199 = vunpack.c.l.b16 %v75
    %v200 = vunpack.c.h.b16 %v75
    %v201 = vunpack.c.l.b16 %v76
    %v202 = vunpack.c.h.b16 %v76
    %v203 = vunpack.c.l.b16 %v77
    %v204 = vunpack.c.h.b16 %v77
    %v205 = vunpack.c.l.b16 %v78
    %v206 = vunpack.c.h.b16 %v78
    %v207 = vpack.c.b16 %v145, %v143
    %v208 = vpack.c.b16 %v146, %v144
    %v209 = vpack.c.b16 %v149, %v147
    %v210 = vpack.c.b16 %v150, %v148
    %v211 = vpack.c.b16 %v153, %v151
    %v212 = vpack.c.b16 %v154, %v152
    %v213 = vpack.c.b16 %v157, %v155
    %v214 = vpack.c.b16 %v158, %v156
    %v215 = vpack.c.b16 %v161, %v159
    %v216 = vpack.c.b16 %v162, %v160
    %v217 = vpack.c.b16 %v165, %v163
    %v218 = vpack.c.b16 %v166, %v164
    %v219 = vpack.c.b16 %v169, %v167
    %v220 = vpack.c.b16 %v170, %v168
    %v221 = vpack.c.b16 %v173, %v171
    %v222 = vpack.c.b16 %v174, %v172
    %v223 = vpack.c.b16 %v177, %v175
    %v224 = vpack.c.b16 %v178, %v176
    %v225 = vpack.c.b16 %v181, %v179
    %v226 = vpack.c.b16 %v182, %v180
    %v227 = vpack.c.b16 %v185, %v183
    %v228 = vpack.c.b16 %v186, %v184
    %v229 = vpack.c.b16 %v189, %v187
    %v230 = vpack.c.b16 %v190, %v188
    %v231 = vpack.c.b16 %v193, %v191
    %v232 = vpack.c.b16 %v194, %v192
    %v233 = vpack.c.b16 %v197, %v195
    %v234 = vpack.c.b16 %v198, %v196
    %v235 = vpack.c.b16 %v201, %v199
    %v236 = vpack.c.b16 %v202, %v200
    %v237 = vpack.c.b16 %v205, %v203
    %v238 = vpack.c.b16 %v206, %v204
    %271 = vmatprep.subr.bf16.mxu0 %v222
    %272 = vmatpush1.bf16.msra.mxu0 %v221
    %273 = vmatprep.subr.bf16.mxu0 %v220
    %274 = vmatpush1.bf16.msra.mxu0 %v219
    %275 = vmatprep.subr.bf16.mxu0 %v218
    %276 = vmatpush1.bf16.msra.mxu0 %v217
    %277 = vmatprep.subr.bf16.mxu0 %v216
    %278 = vmatpush1.bf16.msra.mxu0 %v215
    %279 = vmatprep.subr.bf16.mxu0 %v214
    %280 = vmatpush1.bf16.msra.mxu0 %v213
    %281 = vmatprep.subr.bf16.mxu0 %v212
    %282 = vmatpush1.bf16.msra.mxu0 %v211
    %283 = vmatprep.subr.bf16.mxu0 %v210
    %284 = vmatpush1.bf16.msra.mxu0 %v209
    %285 = vmatprep.subr.bf16.mxu0 %v208
    %286 = vmatpush1.bf16.msra.mxu0 %v207
    %287 = vmatprep.subr.bf16.mxu0 %v238
    %288 = vmatpush2.bf16.msra.mxu0 %v237
    %289 = vmatprep.subr.bf16.mxu0 %v236
    %290 = vmatpush2.bf16.msra.mxu0 %v235
    %291 = vmatprep.subr.bf16.mxu0 %v234
    %292 = vmatpush2.bf16.msra.mxu0 %v233
    %293 = vmatprep.subr.bf16.mxu0 %v232
    %294 = vmatpush2.bf16.msra.mxu0 %v231
    %295 = vmatprep.subr.bf16.mxu0 %v230
    %296 = vmatpush2.bf16.msra.mxu0 %v229
    %297 = vmatprep.subr.bf16.mxu0 %v228
    %298 = vmatpush2.bf16.msra.mxu0 %v227
    %299 = vmatprep.subr.bf16.mxu0 %v226
    %300 = vmatpush2.bf16.msra.mxu0 %v225
    %301 = vmatprep.subr.bf16.mxu0 %v224
    %302 = vmatpush2.bf16.msra.mxu0 %v223
    %303 = vmatprep.mubr.bf16.mxu0 %v104
    %304 = vmatmul.mubr.bf16.gmra.mxu0 %v103
    %v305 = vpop.f32.mrf.mxu0
    %v306 = vadd.f32 %v84, %v305
    %v307 = vpop.f32.mrf.mxu0
    %v308 = vadd.f32 %v88, %v307
    %v309 = vpop.f32.mrf.mxu0
    %v310 = vadd.f32 %v84, %v309
    %v311 = vpop.f32.mrf.mxu0
    %v312 = vadd.f32 %v88, %v311
    %313 = vmatprep.mubr.bf16.mxu0 %v106
    %314 = vmatmul.mubr.bf16.gmra.mxu0 %v105
    %v315 = vpop.f32.mrf.mxu0
    %v316 = vadd.f32 %v84, %v315
    %v317 = vpop.f32.mrf.mxu0
    %v318 = vadd.f32 %v88, %v317
    %v319 = vpop.f32.mrf.mxu0
    %v320 = vadd.f32 %v84, %v319
    %v321 = vpop.f32.mrf.mxu0
    %v322 = vadd.f32 %v88, %v321
    %323 = vdwg.mxu0
    %324 = vst [vmem:[#allocation7] sm:$0xff] %v306
    %325 = vst [vmem:[#allocation7 + $0x8] sm:$0xff] %v308
    %326 = vst [vmem:[#allocation7 + $0x10] sm:$0xff] %v310
    %327 = vst [vmem:[#allocation7 + $0x18] sm:$0xff] %v312
    %328 = vst [vmem:[#allocation7 + $0x20] sm:$0xff] %v316
    %329 = vst [vmem:[#allocation7 + $0x28] sm:$0xff] %v318
    %330 = vst [vmem:[#allocation7 + $0x30] sm:$0xff] %v320
    %331 = vst [vmem:[#allocation7 + $0x38] sm:$0xff] %v322
    // Predicated region
    $region22: #{tpu_custom_call.1} parent=1 // pred_check
      _
    $region23: #{tpu_custom_call.1} parent=1 // pred_check_branch
      %333 = sbr.rel (0) target = $region25
    $region24: #{tpu_custom_call.1} parent=1 // pred_region
      %s335 = ssub.s32 1024, 1024
      %336 = vsyncadd [#allocation4], %s335
      %s337 = sshll.u32 [#allocation7], 4
      %s338 = int_to_ptr.vmem [resolvable:$true] %s337
      %343 = dma.vmem_to_hbm [thread:$0]  %s338, 1024, %s3, [#allocation4], 256, 256, 16
    $region25: #{tpu_custom_call.1} parent=1 // pred_fallthru
      _
    // Predicated region
    $region26: #{tpu_custom_call.1} parent=1 // pred_check
      _
    $region27: #{tpu_custom_call.1} parent=1 // pred_check_branch
      %345 = sbr.rel (0) target = $region29
    $region28: #{tpu_custom_call.1} parent=1 // pred_region
      %346 = dma.done [#allocation4], 1024
    $region29: #{tpu_custom_call.1} parent=1 // pred_fallthru
      _
    %347 = vsyncpa [#allocation3], 1
    %348 = vsyncpa [#allocation6], 1
    %349 = vsyncpa [#allocation4], 1

</llo_original>
